<compile_context>
chip_gen: v6e
topology: v6e:2x2x1
jax: 0.10.0
libtpu: 0.0.40
codegen_flags: <defaults>
</compile_context>

<pallas_src>
import math
import functools

import numpy as np
import jax
import jax.numpy as jnp
from jax import lax
from jax.experimental import pallas as pl
from jax.experimental.pallas import tpu as pltpu

DROP_P = 0.1
KEEP_P = 1.0 - DROP_P
# keep element iff hashed-uint32 < KEEP_P * 2^32  (numpy scalar -> inlined literal)
_KEEP_THRESHOLD = np.uint32(min(int(round(KEEP_P * (2 ** 32))), 2 ** 32 - 1))

_LANES = 128
_SUBLANES = 8
_TILE_BYTES = 4 * 1024 * 1024           # per-buffer tile target (x/out/pe double-buffered)
_VMEM_LIMIT = 40 * 1024 * 1024          # explicit scoped-VMEM request (safe on v5e..v7x)


def _pos_encoding_kernel(seed_ref, x_ref, pe_ref, o_ref, *, rows_total, tile_rows, training):
    # Blocks are (1, TR, 128); pe block matches so the add is broadcast-free.
    y = x_ref[...] + pe_ref[...]

    if training:
        # Dropout(p=0.1): zero w.p. p, scale kept elements by 1/(1-p).
        # Counter-based hash PRNG: bits = fmix32(global_element_index ^ seed*phi).
        # Pure VPU integer ops -> lowers everywhere, deterministic w.r.t. tiling.
        i = pl.program_id(0)
        b = pl.program_id(1)
        row0 = (b * rows_total + i * tile_rows).astype(jnp.uint32)
        rows = lax.broadcasted_iota(jnp.int32, y.shape, 1).astype(jnp.uint32)
        lanes = lax.broadcasted_iota(jnp.int32, y.shape, 2).astype(jnp.uint32)
        idx = (row0 + rows) * np.uint32(_LANES) + lanes

        seed_u = seed_ref[0].astype(jnp.uint32)
        h = idx ^ (seed_u * np.uint32(0x9E3779B1))
        h = h ^ (h >> 16)
        h = h * np.uint32(0x85EBCA6B)
        h = h ^ (h >> 13)
        h = h * np.uint32(0xC2B2AE35)
        h = h ^ (h >> 16)
        keep = h < _KEEP_THRESHOLD

        y = jnp.where(keep, y * (1.0 / KEEP_P), jnp.zeros_like(y))

    o_ref[...] = y.astype(o_ref.dtype)


def make_pos_embed(max_seq_length, d_model, dtype=jnp.float32):
    """Sinusoidal positional embedding, identical to the PyTorch __init__."""
    position = jnp.arange(0, max_seq_length, dtype=jnp.float32)[:, None]        # (S, 1)
    div_term = jnp.exp(
        jnp.arange(0, d_model, 2, dtype=jnp.float32) * -(math.log(10000.0) / d_model)
    )                                                                            # (D/2,)
    pe = jnp.zeros((max_seq_length, d_model), dtype=jnp.float32)
    pe = pe.at[:, 0::2].set(jnp.sin(position * div_term))
    pe = pe.at[:, 1::2].set(jnp.cos(position * div_term))
    return pe[None].astype(dtype)                                                # (1, S, D)


def positional_encoding(x, pos_embed, seed=0, training=True):
    """x: (B, S, D); pos_embed: (1, S, D). Returns dropout(x + pos_embed)."""
    B, S, D = x.shape
    assert pos_embed.shape == (1, S, D)
    pe = pos_embed if pos_embed.dtype == x.dtype else pos_embed.astype(x.dtype)
    itemsize = jnp.dtype(x.dtype).itemsize
    total = S * D

    # Lane-dense layout: flatten (S, D), pad to a multiple of 8*128 so P is a multiple
    # of 8 and every block satisfies the (8, 128) rule with unmasked full-lane stores.
    P = pl.cdiv(total, _SUBLANES * _LANES) * _SUBLANES         # rows in 128-wide view
    padded = P * _LANES
    x_flat = x.reshape(B, total)
    pe_flat = pe.reshape(total)
    if padded != total:
        x_flat = jnp.pad(x_flat, ((0, 0), (0, padded - total)))
        pe_flat = jnp.pad(pe_flat, ((0, padded - total),))
    x3 = x_flat.reshape(B, P, _LANES)
    pe3 = pe_flat.reshape(1, P, _LANES)

    # Largest multiple-of-8 row tile under the budget; edge block (if any) is masked.
    cap_rows = max(_SUBLANES, (_TILE_BYTES // (_LANES * itemsize)) // _SUBLANES * _SUBLANES)
    TR = min(P, cap_rows)
    n_s = pl.cdiv(P, TR)

    kernel = functools.partial(
        _pos_encoding_kernel, rows_total=P, tile_rows=TR, training=training)
    seed_arr = jnp.asarray([seed], dtype=jnp.int32)

    out3 = pl.pallas_call(
        kernel,
        out_shape=jax.ShapeDtypeStruct((B, P, _LANES), x.dtype),
        grid_spec=pltpu.PrefetchScalarGridSpec(
            num_scalar_prefetch=1,                       # seed lands in SMEM
            grid=(n_s, B),                               # row tiles outer, batch inner
            in_specs=[
                pl.BlockSpec((1, TR, _LANES), lambda i, b, seed: (b, i, 0)),   # x
                pl.BlockSpec((1, TR, _LANES), lambda i, b, seed: (0, i, 0)),   # pe (resident over b)
            ],
            out_specs=pl.BlockSpec((1, TR, _LANES), lambda i, b, seed: (b, i, 0)),
        ),
        compiler_params=pltpu.CompilerParams(
            dimension_semantics=("parallel", "parallel"),  # both axes independent (v7x 2-TC split)
            vmem_limit_bytes=_VMEM_LIMIT,
        ),
    )(seed_arr, x3, pe3)

    out = out3.reshape(B, padded)
    if padded != total:
        out = out[:, :total]
    return out.reshape(B, S, D)


if __name__ == "__main__":
    key = jax.random.PRNGKey(0)
    k1, k2 = jax.random.split(key)

    # Small, module-consistent shape: batch=2, seq=8, d_model=32.
    B, S, D = 2, 8, 32
    x = jax.random.normal(k1, (B, S, D), dtype=jnp.float32)
    pe = make_pos_embed(max_seq_length=S, d_model=D)

    out_train = jax.block_until_ready(positional_encoding(x, pe, seed=0, training=True))
    out_eval = jax.block_until_ready(positional_encoding(x, pe, seed=0, training=False))
    assert out_train.shape == (B, S, D)
    assert jnp.allclose(out_eval, x + pe, atol=1e-6)

    # Larger shape: exercises a padding-free lane-dense view and the dropout statistics.
    B2, S2, D2 = 2, 64, 32
    x2 = jax.random.normal(k2, (B2, S2, D2), dtype=jnp.float32)
    pe2 = make_pos_embed(max_seq_length=S2, d_model=D2)
    o2t = jax.block_until_ready(positional_encoding(x2, pe2, seed=3, training=True))
    o2e = jax.block_until_ready(positional_encoding(x2, pe2, seed=3, training=False))
    assert jnp.allclose(o2e, x2 + pe2, atol=1e-6)

    # Dropout sanity: ~10% zeros, kept elements scaled by 1/0.9.
    drop_frac = float(jnp.mean((o2t == 0.0).astype(jnp.float32)))
    assert 0.02 < drop_frac < 0.25, drop_frac
    kept = o2t != 0.0
    ref_kept = (x2 + pe2) / KEEP_P
    assert jnp.allclose(jnp.where(kept, o2t, 0.0), jnp.where(kept, ref_kept, 0.0), atol=1e-5)

    print("KERNEL_OK")
</pallas_src>

<mosaic_0001>
module attributes {stable_mosaic.version = 11 : i64} {
  func.func @_pos_encoding_kernel(%arg0: i32, %arg1: i32, %arg2: memref<1xi32, #tpu.memory_space<smem>>, %arg3: memref<1x8x128xf32, #tpu.memory_space<vmem>>, %arg4: memref<1x8x128xf32, #tpu.memory_space<vmem>>, %arg5: memref<1x8x128xf32, #tpu.memory_space<vmem>>) attributes {dimension_semantics = [#tpu.dimension_semantics<parallel>, #tpu.dimension_semantics<parallel>], iteration_bounds = array<i64: 1, 2>, scalar_prefetch = 1 : i64, scratch_operands = 0 : i64, tpu.core_type = #tpu.core_type<tc>, window_params = [{transform_indices = @transform_0, window_bounds = array<i64: 1, 8, 128>}, {transform_indices = @transform_1, window_bounds = array<i64: 1, 8, 128>}, {transform_indices = @transform_2, window_bounds = array<i64: 1, 8, 128>}]} {
    %c0 = arith.constant 0 : index
    %c0_0 = arith.constant 0 : index
    %c0_1 = arith.constant 0 : index
    %0 = vector.load %arg3[%c0, %c0_0, %c0_1] : memref<1x8x128xf32, #tpu.memory_space<vmem>>, vector<1x8x128xf32>
    %c0_2 = arith.constant 0 : index
    %c0_3 = arith.constant 0 : index
    %c0_4 = arith.constant 0 : index
    %1 = vector.load %arg4[%c0_2, %c0_3, %c0_4] : memref<1x8x128xf32, #tpu.memory_space<vmem>>, vector<1x8x128xf32>
    %2 = arith.addf %0, %1 : vector<1x8x128xf32>
    %c8_i32 = arith.constant 8 : i32
    %3 = arith.muli %arg1, %c8_i32 : i32
    %c8_i32_5 = arith.constant 8 : i32
    %4 = arith.muli %arg0, %c8_i32_5 : i32
    %5 = arith.addi %3, %4 : i32
    %6 = tpu.iota {dimensions = array<i32: 1>} : vector<1x8x128xi32>
    %7 = tpu.iota {dimensions = array<i32: 2>} : vector<1x8x128xi32>
    %8 = vector.broadcast %5 : i32 to vector<1x8x128xi32>
    %9 = arith.addi %8, %6 : vector<1x8x128xi32>
    %c128_i32 = arith.constant 128 : i32
    %10 = vector.broadcast %c128_i32 : i32 to vector<1x8x128xi32>
    %11 = arith.muli %9, %10 : vector<1x8x128xi32>
    %12 = arith.addi %11, %7 : vector<1x8x128xi32>
    %c0_6 = arith.constant 0 : index
    %13 = memref.load %arg2[%c0_6] : memref<1xi32, #tpu.memory_space<smem>>
    %c-1640531535_i32 = arith.constant -1640531535 : i32
    %14 = arith.muli %13, %c-1640531535_i32 : i32
    %15 = vector.broadcast %14 : i32 to vector<1x8x128xi32>
    %16 = arith.xori %12, %15 : vector<1x8x128xi32>
    %c16_i32 = arith.constant 16 : i32
    %17 = vector.broadcast %c16_i32 : i32 to vector<1x8x128xi32>
    %18 = arith.shrui %16, %17 : vector<1x8x128xi32>
    %19 = arith.xori %16, %18 : vector<1x8x128xi32>
    %c-2048144789_i32 = arith.constant -2048144789 : i32
    %20 = vector.broadcast %c-2048144789_i32 : i32 to vector<1x8x128xi32>
    %21 = arith.muli %19, %20 : vector<1x8x128xi32>
    %c13_i32 = arith.constant 13 : i32
    %22 = vector.broadcast %c13_i32 : i32 to vector<1x8x128xi32>
    %23 = arith.shrui %21, %22 : vector<1x8x128xi32>
    %24 = arith.xori %21, %23 : vector<1x8x128xi32>
    %c-1028477387_i32 = arith.constant -1028477387 : i32
    %25 = vector.broadcast %c-1028477387_i32 : i32 to vector<1x8x128xi32>
    %26 = arith.muli %24, %25 : vector<1x8x128xi32>
    %c16_i32_7 = arith.constant 16 : i32
    %27 = vector.broadcast %c16_i32_7 : i32 to vector<1x8x128xi32>
    %28 = arith.shrui %26, %27 : vector<1x8x128xi32>
    %29 = arith.xori %26, %28 : vector<1x8x128xi32>
    %c-429496730_i32 = arith.constant -429496730 : i32
    %30 = vector.broadcast %c-429496730_i32 : i32 to vector<1x8x128xi32>
    %31 = arith.cmpi ult, %29, %30 : vector<1x8x128xi32>
    %cst = arith.constant 1.11111116 : f32
    %32 = vector.broadcast %cst : f32 to vector<1x8x128xf32>
    %33 = arith.mulf %2, %32 : vector<1x8x128xf32>
    %cst_8 = arith.constant 0.000000e+00 : f32
    %34 = vector.broadcast %cst_8 : f32 to vector<1x8x128xf32>
    %35 = arith.select %31, %33, %34 : vector<1x8x128xi1>, vector<1x8x128xf32>
    %c0_9 = arith.constant 0 : index
    %c0_10 = arith.constant 0 : index
    %c0_11 = arith.constant 0 : index
    %36 = vector.load %arg5[%c0_9, %c0_10, %c0_11] : memref<1x8x128xf32, #tpu.memory_space<vmem>>, vector<1x8x128xf32>
    tpu.vector_store %arg5[%c0_9, %c0_10, %c0_11], %35 {strides = array<i32>} : memref<1x8x128xf32, #tpu.memory_space<vmem>>, vector<1x8x128xf32>,
    return
  }
  func.func @transform_0(%arg0: i32, %arg1: i32, %arg2: memref<1xi32, #tpu.memory_space<smem>>) -> (i32, i32, i32) {
    %c0_i32 = arith.constant 0 : i32
    %c0_i32_0 = arith.constant 0 : i32
    return %arg1, %arg0, %c0_i32 : i32, i32, i32
  }
  func.func @transform_1(%arg0: i32, %arg1: i32, %arg2: memref<1xi32, #tpu.memory_space<smem>>) -> (i32, i32, i32) {
    %c0_i32 = arith.constant 0 : i32
    %c0_i32_0 = arith.constant 0 : i32
    %c0_i32_1 = arith.constant 0 : i32
    return %c0_i32, %arg0, %c0_i32_0 : i32, i32, i32
  }
  func.func @transform_2(%arg0: i32, %arg1: i32, %arg2: memref<1xi32, #tpu.memory_space<smem>>) -> (i32, i32, i32) {
    %c0_i32 = arith.constant 0 : i32
    %c0_i32_0 = arith.constant 0 : i32
    return %arg1, %arg0, %c0_i32 : i32, i32, i32
  }
}

</mosaic_0001>

<llo_original>
// kernel: tpu_custom_call.1
$region0: #{tpu_custom_call.1}
  #allocation0 [shape = 'u32[]', space=smem, size = 0x4, offset = 0x4, fixed_abs, tag = 'smem constant byte address 0x4 - core index']
  #allocation1 [shape = 'u32[144,128]{1,0:T(1,128)}', space=vmem, size = 0x12000, scoped, tag = 'internal scratch']
  #allocation2 [shape = 's32[1]{0}', space=sflag, size = 0x4, scoped, tag = 'scoped memory for tpu_custom_call.1']
  #allocation3 [shape = 's32[1]{0:T(128)S(6)}', space=smem, size = 0x200, scoped, tag = 'prefetched SMEM operand 0']
  %s0 = inlined_call_operand.<no memory space> [shape: s32[1], index: 0, kind: input, shape index: {}]
  %s1 = inlined_call_operand.hbm [shape: f32[2,8,128], index: 1, kind: input, shape index: {}]
  %s2 = inlined_call_operand.hbm [shape: f32[1,8,128], index: 2, kind: input, shape index: {}]
  %s3 = inlined_call_operand.hbm [shape: f32[2,8,128], index: 3, kind: output, shape index: {}]
  %s4 = sld [smem:[#allocation0]]
  $region49: #{tpu_custom_call.1} parent=0
    _
  %s6 = ssub.s32 1, %s4
  %s7 = scalar_select 0, %s6, %s4
  %8 = sst [smem:[#allocation3]] %s0
  $region1: #{tpu_custom_call.1} parent=0
    #allocation4 [shape = 'u8[8192]{0}', space=vmem, size = 0x2000, scoped, tag = 'input window, operand 1']
    #allocation5 [shape = 's32[2]{0}', space=sflag, size = 0x8, scoped, tag = 'scoped memory for tpu_custom_call.1']
    #allocation6 [shape = 's32[2]{0}', space=sflag, size = 0x8, scoped, tag = 'scoped memory for tpu_custom_call.1']
    #allocation7 [shape = 'u8[4096]{0}', space=vmem, size = 0x1000, scoped, tag = 'input window, operand 2, single buffered']
    #allocation8 [shape = 's32[1]{0}', space=sflag, size = 0x4, scoped, tag = 'scoped memory for tpu_custom_call.1']
    #allocation9 [shape = 'u8[8192]{0}', space=vmem, size = 0x2000, scoped, tag = 'output window, operand 0']
    %9 = vsyncpa [#allocation5], 0
    %s10 = scalar_lea.sflag [#allocation5], 1
    %11 = vsyncpa %s10, 0
    %12 = vsyncpa [#allocation8], 0
    %13 = vsyncpa [#allocation6], 0
    %s14 = scalar_lea.sflag [#allocation6], 1
    %15 = vsyncpa %s14, 0
    loop: start=0, step=1, limit=4
    $region2: #{tpu_custom_call.1} parent=1 // loop_pre_header
      _
    $region3: #{tpu_custom_call.1} parent=1 // loop_header
      %s17 = sphi 0, %s21
      %p18 = scmp.ge.s32.totalorder %s17, 4
      %s24 = sphi 0, %s36
      %s25 = sphi 0, %s32
      %s26 = sphi 0, %s24
      %s27 = sphi 0, %s25
      %s28 = sphi 0, %s26
      %s29 = sphi 0, %s27
      %s41 = sphi 0, %s43
      %s44 = sphi 0, %s41
      %s45 = sphi 0, %s44
      %s61 = sphi 0, %s45
      %s67 = sphi 0, %s69
      %s70 = sphi 0, %s67
      %s71 = sphi 0, %s70
      %s87 = sphi 0, %s71
      %s95 = sphi 0, %s97
      %s98 = sphi 0, %s95
      %s99 = sphi 0, %s98
      %s115 = sphi 0, %s99
    $region4: #{tpu_custom_call.1} parent=1 // loop_header_branch
      %20 = sbr.rel (%p18) target = $region8
    $region5: #{tpu_custom_call.1} parent=1 // loop_body
      %s22 = ssub.s32 %s17, 1
      %s23 = ssub.s32 %s17, 2
      %s30 = sadd.s32 1, %s25
      %p31 = scmp.ge.s32.totalorder %s30, 2
      %s32 = scalar_select %p31, 0, %s30
      %s33 = sadd.s32 1, %s24
      %s34 = scalar_select %p31, %s33, %s24
      %p35 = scmp.ge.s32.totalorder %s34, 1
      %s36 = scalar_select %p35, 0, %s34
      %s37 = ssub.s32 %s25, %s32
      %s38 = ssub.s32 %s24, %s36
      %s39 = sor.u32 %s37, %s38
      %p40 = scmp.eq.s32.totalorder %s39, 0
      %s42 = sadd.s32 %s41, 1
      %s43 = scalar_select %p40, %s41, %s42
      %p46 = pneg %p40
      %p47 = scmp.eq.s32.totalorder %s17, 1
      %p48 = por %p46, %p47
      %p49 = scmp.ne.s32.totalorder %s41, %s44
      %p50 = scmp.eq.s32.totalorder %s17, 0
      %p51 = por %p49, %p50
      %p52 = scmp.ne.s32.totalorder %s41, %s44
      %p53 = scmp.eq.s32.totalorder %s22, 1
      %p54 = por %p52, %p53
      %p55 = scmp.ne.s32.totalorder %s44, %s45
      %p56 = scmp.eq.s32.totalorder %s22, 0
      %p57 = por %p55, %p56
      %p58 = scmp.ne.s32.totalorder %s44, %s45
      %p59 = scmp.eq.s32.totalorder %s23, 1
      %p60 = por %p58, %p59
      %p62 = scmp.ne.s32.totalorder %s45, %s61
      %p63 = scmp.eq.s32.totalorder %s23, 0
      %p64 = por %p62, %p63
      %s65 = ssub.s32 %s24, %s36
      %p66 = scmp.eq.s32.totalorder %s65, 0
      %s68 = sadd.s32 %s67, 1
      %s69 = scalar_select %p66, %s67, %s68
      %p72 = pneg %p66
      %p73 = scmp.eq.s32.totalorder %s17, 1
      %p74 = por %p72, %p73
      %p75 = scmp.ne.s32.totalorder %s67, %s70
      %p76 = scmp.eq.s32.totalorder %s17, 0
      %p77 = por %p75, %p76
      %p78 = scmp.ne.s32.totalorder %s67, %s70
      %p79 = scmp.eq.s32.totalorder %s22, 1
      %p80 = por %p78, %p79
      %p81 = scmp.ne.s32.totalorder %s70, %s71
      %p82 = scmp.eq.s32.totalorder %s22, 0
      %p83 = por %p81, %p82
      %p84 = scmp.ne.s32.totalorder %s70, %s71
      %p85 = scmp.eq.s32.totalorder %s23, 1
      %p86 = por %p84, %p85
      %p88 = scmp.ne.s32.totalorder %s71, %s87
      %p89 = scmp.eq.s32.totalorder %s23, 0
      %p90 = por %p88, %p89
      %s91 = ssub.s32 %s25, %s32
      %s92 = ssub.s32 %s24, %s36
      %s93 = sor.u32 %s91, %s92
      %p94 = scmp.eq.s32.totalorder %s93, 0
      %s96 = sadd.s32 %s95, 1
      %s97 = scalar_select %p94, %s95, %s96
      %p100 = pneg %p94
      %p101 = scmp.eq.s32.totalorder %s17, 1
      %p102 = por %p100, %p101
      %p103 = scmp.ne.s32.totalorder %s95, %s98
      %p104 = scmp.eq.s32.totalorder %s17, 0
      %p105 = por %p103, %p104
      %p106 = scmp.ne.s32.totalorder %s95, %s98
      %p107 = scmp.eq.s32.totalorder %s22, 1
      %p108 = por %p106, %p107
      %p109 = scmp.ne.s32.totalorder %s98, %s99
      %p110 = scmp.eq.s32.totalorder %s22, 0
      %p111 = por %p109, %p110
      %p112 = scmp.ne.s32.totalorder %s98, %s99
      %p113 = scmp.eq.s32.totalorder %s23, 1
      %p114 = por %p112, %p113
      %p116 = scmp.ne.s32.totalorder %s99, %s115
      %p117 = scmp.eq.s32.totalorder %s23, 0
      %p118 = por %p116, %p117
      %p119 = scmp.le.s32.totalorder 1, %s17
      %p120 = scmp.lt.s32.totalorder %s17, 3
      %p121 = pnand %p119, %p120
      %p122 = pneg %p121
      // Predicated region
      $region9: #{tpu_custom_call.1} parent=5 // pred_check
        _
      $region10: #{tpu_custom_call.1} parent=5 // pred_check_branch
        %124 = sbr.rel (%p121) target = $region12
      $region11: #{tpu_custom_call.1} parent=5 // pred_region
        %s125 = ssub.s32 %s17, 1
        // Predicated region
        $region13: #{tpu_custom_call.1} parent=11 // pred_check
          %p126 = pneg %p83
        $region14: #{tpu_custom_call.1} parent=11 // pred_check_branch
          %128 = sbr.rel (%p126) target = $region16
        $region15: #{tpu_custom_call.1} parent=11 // pred_region
          %s130 = ssub.s32 128, 128
          %131 = vsyncadd [#allocation8], %s130
          %s132 = smul.addr %s26, 128
          %s133 = scalar_lea.hbm %s2, %s132
          %s135 = sshll.u32 [#allocation7], 4
          %s136 = int_to_ptr.vmem [resolvable:$true] %s135
          %138 = dma.hbm_to_vmem [thread:$0]  %s133, 128, %s136, [#allocation8]
        $region16: #{tpu_custom_call.1} parent=11 // pred_fallthru
          _
      $region12: #{tpu_custom_call.1} parent=5 // pred_fallthru
        _
      %p139 = scmp.lt.s32.totalorder %s17, 2
      // Predicated region
      $region17: #{tpu_custom_call.1} parent=5 // pred_check
        %p140 = pneg %p139
      $region18: #{tpu_custom_call.1} parent=5 // pred_check_branch
        %142 = sbr.rel (%p140) target = $region20
      $region19: #{tpu_custom_call.1} parent=5 // pred_region
        // Predicated region
        $region21: #{tpu_custom_call.1} parent=19 // pred_check
          %p143 = pneg %p51
        $region22: #{tpu_custom_call.1} parent=19 // pred_check_branch
          %145 = sbr.rel (%p143) target = $region24
        $region23: #{tpu_custom_call.1} parent=19 // pred_region
          %s146 = sand.u32 %s41, 1
          %s147 = scalar_lea.sflag [#allocation5], %s146
          %s148 = sand.u32 %s41, 1
          %s149 = smul.addr %s148, 8
          %s150 = scalar_lea.vmem [#allocation4], %s149
          %s152 = ssub.s32 128, 128
          %153 = vsyncadd %s147, %s152
          %s154 = sadd.s32 %s24, %s25
          %s155 = smul.addr %s154, 128
          %s156 = scalar_lea.hbm %s1, %s155
          %s158 = sshll.u32 %s150, 4
          %s159 = int_to_ptr.vmem [resolvable:$true] %s158
          %161 = dma.hbm_to_vmem [thread:$0]  %s156, 128, %s159, %s147
        $region24: #{tpu_custom_call.1} parent=19 // pred_fallthru
          _
      $region20: #{tpu_custom_call.1} parent=5 // pred_fallthru
        _
      %p162 = scmp.le.s32.totalorder 1, %s17
      %p163 = scmp.lt.s32.totalorder %s17, 3
      %p164 = pnand %p162, %p163
      %p165 = pneg %p164
      // Predicated region
      $region25: #{tpu_custom_call.1} parent=5 // pred_check
        _
      $region26: #{tpu_custom_call.1} parent=5 // pred_check_branch
        %167 = sbr.rel (%p164) target = $region28
      $region27: #{tpu_custom_call.1} parent=5 // pred_region
        %s168 = ssub.s32 %s17, 1
        %s169 = sand.u32 %s44, 1
        %s170 = scalar_lea.sflag [#allocation5], %s169
        %s171 = sand.u32 %s44, 1
        %s172 = smul.addr %s171, 8
        %s173 = scalar_lea.vmem [#allocation4], %s172
        // Predicated region
        $region29: #{tpu_custom_call.1} parent=27 // pred_check
          %p174 = pneg %p57
        $region30: #{tpu_custom_call.1} parent=27 // pred_check_branch
          %176 = sbr.rel (%p174) target = $region32
        $region31: #{tpu_custom_call.1} parent=27 // pred_region
          %177 = dma.done %s170, 128
        $region32: #{tpu_custom_call.1} parent=27 // pred_fallthru
          _
        // Predicated region
        $region33: #{tpu_custom_call.1} parent=27 // pred_check
          %p178 = pneg %p83
        $region34: #{tpu_custom_call.1} parent=27 // pred_check_branch
          %180 = sbr.rel (%p178) target = $region36
        $region35: #{tpu_custom_call.1} parent=27 // pred_region
          %181 = dma.done [#allocation8], 128
        $region36: #{tpu_custom_call.1} parent=27 // pred_fallthru
          _
        %s182 = sand.u32 %s44, 1
        %s183 = scalar_lea.sflag [#allocation5], %s182
        %s184 = sand.u32 %s44, 1
        %s185 = smul.addr %s184, 8
        %s186 = scalar_lea.vmem [#allocation4], %s185
        %p187 = pneg %p57
        %p188 = pneg %p54
        %p189 = pneg %p83
        %p190 = pneg %p80
        %p191 = pneg %p111
        %p192 = pneg %p108
        %s193 = sand.u32 %s98, 1
        %s194 = scalar_lea.sflag [#allocation6], %s193
        %s195 = sand.u32 %s98, 1
        %s196 = smul.addr %s195, 8
        %s197 = scalar_lea.vmem [#allocation9], %s196
        %v198 = vld [vmem:[%s173] sm:$0xff]
        %v199 = vld [vmem:[#allocation7] sm:$0xff]
        %v200 = vadd.f32 %v198, %v199
        %s201 = smul.u32 %s27, 8
        %s202 = smul.u32 %s26, 8
        %s203 = sadd.s32 %s201, %s202
        %v204 = vlaneseq
        %v205 = vshrl.u32 %v204, 7
        %v206 = vlaneseq
        %v207 = vand.u32 %v206, 127
        %v208 = vstv %s203
        %v209 = vadd.s32 %v208, %v205
        %v210 = vmul.u32 %v209, 128
        %v211 = vadd.s32 %v210, %v207
        %s212 = sld [smem:[#allocation3]]
        %s213 = smul.u32 %s212, 2654435761
        %v214 = vstv %s213
        %v215 = vxor.u32 %v211, %v214
        %v216 = vshrl.u32 %v215, 16
        %v217 = vxor.u32 %v215, %v216
        %v218 = vmul.u32 %v217, 2246822507
        %v219 = vshrl.u32 %v218, 13
        %v220 = vxor.u32 %v218, %v219
        %v221 = vmul.u32 %v220, 3266489909
        %v222 = vshrl.u32 %v221, 16
        %v223 = vxor.u32 %v221, %v222
        %vm224 = vcmp.lt.u32.totalorder %v223, 3865470566
        %v225 = vmul.f32 %v200, 1.1111112
        %v226 = vsel %vm224, %v225, 0.0
        %227 = vst [vmem:[%s197] sm:$0xff] %v226
        %s228 = sand.u32 %s98, 1
        %s229 = scalar_lea.sflag [#allocation6], %s228
        %s230 = sand.u32 %s98, 1
        %s231 = smul.addr %s230, 8
        %s232 = scalar_lea.vmem [#allocation9], %s231
        // Predicated region
        $region37: #{tpu_custom_call.1} parent=27 // pred_check
          %p233 = pneg %p108
        $region38: #{tpu_custom_call.1} parent=27 // pred_check_branch
          %235 = sbr.rel (%p233) target = $region40
        $region39: #{tpu_custom_call.1} parent=27 // pred_region
          %s237 = ssub.s32 128, 128
          %238 = vsyncadd %s229, %s237
          %s239 = sadd.s32 %s26, %s27
          %s240 = smul.addr %s239, 128
          %s241 = scalar_lea.hbm %s3, %s240
          %s243 = sshll.u32 %s232, 4
          %s244 = int_to_ptr.vmem [resolvable:$true] %s243
          %246 = dma.vmem_to_hbm [thread:$0]  %s244, 128, %s241, %s229
        $region40: #{tpu_custom_call.1} parent=27 // pred_fallthru
          _
      $region28: #{tpu_custom_call.1} parent=5 // pred_fallthru
        _
      %p247 = scmp.le.s32.totalorder 2, %s17
      // Predicated region
      $region41: #{tpu_custom_call.1} parent=5 // pred_check
        %p248 = pneg %p247
      $region42: #{tpu_custom_call.1} parent=5 // pred_check_branch
        %250 = sbr.rel (%p248) target = $region44
      $region43: #{tpu_custom_call.1} parent=5 // pred_region
        %s251 = ssub.s32 %s17, 2
        // Predicated region
        $region45: #{tpu_custom_call.1} parent=43 // pred_check
          %p252 = pneg %p114
        $region46: #{tpu_custom_call.1} parent=43 // pred_check_branch
          %254 = sbr.rel (%p252) target = $region48
        $region47: #{tpu_custom_call.1} parent=43 // pred_region
          %s255 = sand.u32 %s99, 1
          %s256 = scalar_lea.sflag [#allocation6], %s255
          %s257 = sand.u32 %s99, 1
          %s258 = smul.addr %s257, 8
          %s259 = scalar_lea.vmem [#allocation9], %s258
          %260 = dma.done %s256, 128
        $region48: #{tpu_custom_call.1} parent=43 // pred_fallthru
          _
      $region44: #{tpu_custom_call.1} parent=5 // pred_fallthru
        _
    $region6: #{tpu_custom_call.1} parent=1 // loop_footer
      %s21 = sadd.s32 1, %s17
    $region7: #{tpu_custom_call.1} parent=1 // loop_footer_branch
      %16 = sbr.rel target = $region3
    $region8: #{tpu_custom_call.1} parent=1 // loop_exit
      _
    %261 = vsyncpa [#allocation5], 1
    %s262 = scalar_lea.sflag [#allocation5], 1
    %263 = vsyncpa %s262, 1
    %264 = vsyncpa [#allocation8], 1
    %265 = vsyncpa [#allocation6], 1
    %s266 = scalar_lea.sflag [#allocation6], 1
    %267 = vsyncpa %s266, 1

</llo_original>
